<compile_context>
chip_gen: v6e
topology: v6e:2x2x1
jax: 0.10.0
libtpu: 0.0.40
codegen_flags: <defaults>
</compile_context>

<pallas_src>
import functools

import jax
import jax.numpy as jnp
from jax.experimental import pallas as pl
from jax.experimental.pallas import tpu as pltpu

_LANE = 128


def _round_up(n, m):
    return ((n + m - 1) // m) * m


# ----------------------------------------------------------------------------
# Parameter prep (runs once, outside the forward path)
# ----------------------------------------------------------------------------
def prep_gcn_params(w1, b1, w2, b2, weight_dtype=jnp.bfloat16):
    """Pad hidden/class axes to 128 lanes, cast weights to bf16, and bake the
    class mask into b2 (padded class lanes get a huge negative bias).  Padded
    hidden lanes stay exactly zero through layer 1 (zero W1 cols + zero bias +
    relu) and padded W2 rows/cols contribute nothing, so valid outputs are
    exact."""
    nfeat, nhid = w1.shape
    nclass = w2.shape[1]
    nhid_p = _round_up(nhid, _LANE)
    nclass_p = _round_up(nclass, _LANE)

    w1_p = jnp.zeros((nfeat, nhid_p), weight_dtype).at[:, :nhid].set(
        w1.astype(weight_dtype))
    b1_p = jnp.zeros((1, nhid_p), jnp.float32).at[:, :nhid].set(
        b1.astype(jnp.float32))
    w2_p = jnp.zeros((nhid_p, nclass_p), weight_dtype).at[:nhid, :nclass].set(
        w2.astype(weight_dtype))
    # -1e30 on padded class lanes == the old iota/where mask, for free.
    b2_p = jnp.full((1, nclass_p), -1e30, jnp.float32).at[:, :nclass].set(
        b2.astype(jnp.float32))
    return w1_p, b1_p, w2_p, b2_p, nclass


# ----------------------------------------------------------------------------
# Toy-scale fused kernel: whole graph in one gridless VMEM block
# ----------------------------------------------------------------------------
def gcn_fused_kernel(x_ref, adj_ref, w1_ref, b1_ref, w2_ref, b2_ref, out_ref,
                     *, adj_x_first):
    # x / adj / W1 / W2 arrive already in bf16; accumulate in f32 on the MXU.
    x = x_ref[...]
    adj = adj_ref[...]

    # --- GraphConvolution 1: adj @ (x @ W1) + b1, then ReLU -----------------
    if adj_x_first:
        # (adj @ x) @ W1 — fewer MXU pushes when nfeat < padded hidden width.
        ax = jnp.dot(adj, x, preferred_element_type=jnp.float32)
        h1 = jnp.dot(ax.astype(jnp.bfloat16), w1_ref[...],
                     preferred_element_type=jnp.float32) + b1_ref[...]
    else:
        s1 = jnp.dot(x, w1_ref[...], preferred_element_type=jnp.float32)
        h1 = jnp.dot(adj, s1.astype(jnp.bfloat16),
                     preferred_element_type=jnp.float32) + b1_ref[...]
    h1 = jnp.maximum(h1, 0.0)

    # --- GraphConvolution 2: adj @ (h1 @ W2) + b2 ---------------------------
    s2 = jnp.dot(h1.astype(jnp.bfloat16), w2_ref[...],
                 preferred_element_type=jnp.float32)
    logits = jnp.dot(adj, s2.astype(jnp.bfloat16),
                     preferred_element_type=jnp.float32) + b2_ref[...]

    # --- log_softmax along the (full 128-lane, unmasked) class axis ---------
    # Padded class lanes carry a -1e30 bias, so they vanish under exp().
    m = jnp.max(logits, axis=1, keepdims=True)
    shifted = logits - m
    lse = jnp.log(jnp.sum(jnp.exp(shifted), axis=1, keepdims=True))
    out_ref[...] = shifted - lse


def gcn_forward_fused(x, adj, params):
    """Single pallas_call, whole arrays resident in VMEM.  Use for small N."""
    w1_p, b1_p, w2_p, b2_p, nclass = params
    N, nfeat = x.shape
    nhid_p = w1_p.shape[1]
    nclass_p = w2_p.shape[1]

    xb = x.astype(jnp.bfloat16)
    adjb = adj.astype(jnp.bfloat16)
    adj_x_first = nfeat < nhid_p

    if adj_x_first:
        mm_flops = 2 * N * (N * nfeat + nfeat * nhid_p
                            + nhid_p * nclass_p + N * nclass_p)
    else:
        mm_flops = 2 * N * (nfeat * nhid_p + N * nhid_p
                            + nhid_p * nclass_p + N * nclass_p)
    args = (xb, adjb, w1_p, b1_p, w2_p, b2_p)
    bytes_accessed = (sum(int(a.size) * a.dtype.itemsize for a in args)
                      + N * nclass_p * 4)

    vmem = pl.BlockSpec(memory_space=pltpu.MemorySpace.VMEM)
    out_p = pl.pallas_call(
        functools.partial(gcn_fused_kernel, adj_x_first=adj_x_first),
        out_shape=jax.ShapeDtypeStruct((N, nclass_p), jnp.float32),
        in_specs=[vmem] * 6,
        out_specs=vmem,
        cost_estimate=pl.CostEstimate(
            flops=mm_flops,
            transcendentals=N * (nclass_p + 1),
            bytes_accessed=bytes_accessed),
    )(*args)
    return out_p[:, :nclass]


# ----------------------------------------------------------------------------
# Graph-scale path: adj streamed as (TM, N) row tiles over a parallel grid
# ----------------------------------------------------------------------------
def _support_kernel(x_ref, w_ref, s_ref):
    # s_tile = bf16(x_tile @ W)    (bf16 operands, f32 accumulation)
    s_ref[...] = jnp.dot(x_ref[...], w_ref[...],
                         preferred_element_type=jnp.float32).astype(s_ref.dtype)


def _agg_layer1_kernel(adj_ref, s1_ref, b1_ref, w2_ref, s2_ref):
    # h1_tile = relu(adj_tile @ s1 + b1);  emit s2_tile = bf16(h1_tile @ W2).
    h1 = jnp.dot(adj_ref[...], s1_ref[...],
                 preferred_element_type=jnp.float32) + b1_ref[...]
    h1 = jnp.maximum(h1, 0.0)
    s2_ref[...] = jnp.dot(h1.astype(jnp.bfloat16), w2_ref[...],
                          preferred_element_type=jnp.float32).astype(s2_ref.dtype)


def _agg_layer2_kernel(adj_ref, s2_ref, b2_ref, out_ref):
    logits = jnp.dot(adj_ref[...], s2_ref[...],
                     preferred_element_type=jnp.float32) + b2_ref[...]
    m = jnp.max(logits, axis=1, keepdims=True)
    shifted = logits - m
    lse = jnp.log(jnp.sum(jnp.exp(shifted), axis=1, keepdims=True))
    out_ref[...] = shifted - lse


def gcn_forward_tiled(x, adj, params, *, tm=256,
                      vmem_limit_bytes=48 * 1024 * 1024):
    """Three pipelined passes, each a 1-D 'parallel' grid over row tiles:
      1) s1 = bf16(x @ W1)                       (x streamed in row tiles)
      2) s2 = bf16(relu(adj @ s1 + b1) @ W2)     (adj streamed as (TM,N) tiles)
      3) out = log_softmax(adj @ s2 + b2_mask)   (adj streamed as (TM,N) tiles)
    Supports / weights / biases stay resident via constant index_maps."""
    w1_p, b1_p, w2_p, b2_p, nclass = params
    N, nfeat = x.shape
    nhid_p = w1_p.shape[1]
    nclass_p = w2_p.shape[1]

    n_p = _round_up(N, tm)
    xb = x.astype(jnp.bfloat16)
    adjb = adj.astype(jnp.bfloat16)
    if n_p != N:
        xb = jnp.pad(xb, ((0, n_p - N), (0, 0)))
        adjb = jnp.pad(adjb, ((0, n_p - N), (0, n_p - N)))

    grid = (n_p // tm,)
    cparams = pltpu.CompilerParams(
        dimension_semantics=("parallel",),       # shards tiles across v7x TCs
        vmem_limit_bytes=vmem_limit_bytes)

    # Pass 1: per-row feature transform.
    s1 = pl.pallas_call(
        _support_kernel,
        out_shape=jax.ShapeDtypeStruct((n_p, nhid_p), jnp.bfloat16),
        grid=grid,
        in_specs=[pl.BlockSpec((tm, nfeat), lambda i: (i, 0)),
                  pl.BlockSpec((nfeat, nhid_p), lambda i: (0, 0))],
        out_specs=pl.BlockSpec((tm, nhid_p), lambda i: (i, 0)),
        compiler_params=cparams,
        cost_estimate=pl.CostEstimate(
            flops=2 * n_p * nfeat * nhid_p, transcendentals=0,
            bytes_accessed=2 * (n_p * nfeat + nfeat * nhid_p + n_p * nhid_p)),
    )(xb, w1_p)

    # Pass 2: layer-1 aggregation + ReLU, fused with the layer-2 feature
    # transform (row-wise, so it can be done per tile).
    s2 = pl.pallas_call(
        _agg_layer1_kernel,
        out_shape=jax.ShapeDtypeStruct((n_p, nclass_p), jnp.bfloat16),
        grid=grid,
        in_specs=[pl.BlockSpec((tm, n_p), lambda i: (i, 0)),
                  pl.BlockSpec((n_p, nhid_p), lambda i: (0, 0)),
                  pl.BlockSpec((1, nhid_p), lambda i: (0, 0)),
                  pl.BlockSpec((nhid_p, nclass_p), lambda i: (0, 0))],
        out_specs=pl.BlockSpec((tm, nclass_p), lambda i: (i, 0)),
        compiler_params=cparams,
        cost_estimate=pl.CostEstimate(
            flops=2 * n_p * (n_p * nhid_p + nhid_p * nclass_p),
            transcendentals=0,
            bytes_accessed=2 * (n_p * n_p + n_p * nhid_p + nhid_p * nclass_p
                                + n_p * nclass_p) + 4 * nhid_p),
    )(adjb, s1, b1_p, w2_p)

    # Pass 3: layer-2 aggregation + log_softmax (class mask baked into b2).
    out_p = pl.pallas_call(
        _agg_layer2_kernel,
        out_shape=jax.ShapeDtypeStruct((n_p, nclass_p), jnp.float32),
        grid=grid,
        in_specs=[pl.BlockSpec((tm, n_p), lambda i: (i, 0)),
                  pl.BlockSpec((n_p, nclass_p), lambda i: (0, 0)),
                  pl.BlockSpec((1, nclass_p), lambda i: (0, 0))],
        out_specs=pl.BlockSpec((tm, nclass_p), lambda i: (i, 0)),
        compiler_params=cparams,
        cost_estimate=pl.CostEstimate(
            flops=2 * n_p * n_p * nclass_p,
            transcendentals=n_p * (nclass_p + 1),
            bytes_accessed=2 * (n_p * n_p + 2 * n_p * nclass_p)
                           + 4 * (nclass_p + n_p * nclass_p)),
    )(adjb, s2, b2_p)

    return out_p[:N, :nclass]


# ----------------------------------------------------------------------------
# Init / reference / demo
# ----------------------------------------------------------------------------
def init_gcn_params(key, nfeat, nhid, nclass):
    """Matches pygcn GraphConvolution.reset_parameters:
    uniform(-stdv, stdv) with stdv = 1/sqrt(out_features)."""
    k1, k2, k3, k4 = jax.random.split(key, 4)
    stdv1 = 1.0 / jnp.sqrt(jnp.float32(nhid))
    stdv2 = 1.0 / jnp.sqrt(jnp.float32(nclass))
    w1 = jax.random.uniform(k1, (nfeat, nhid), jnp.float32, -stdv1, stdv1)
    b1 = jax.random.uniform(k2, (nhid,), jnp.float32, -stdv1, stdv1)
    w2 = jax.random.uniform(k3, (nhid, nclass), jnp.float32, -stdv2, stdv2)
    b2 = jax.random.uniform(k4, (nclass,), jnp.float32, -stdv2, stdv2)
    return w1, b1, w2, b2


def reference_forward(x, adj, w1, b1, w2, b2, *, adj_x_first=False):
    """Pure-JAX reference with the same bf16-operand / f32-accumulate matmuls
    (and the same layer-1 ordering) as the kernels."""
    bf, f32 = jnp.bfloat16, jnp.float32
    xb, ab = x.astype(bf), adj.astype(bf)
    w1b, w2b = w1.astype(bf), w2.astype(bf)
    if adj_x_first:
        ax = jnp.dot(ab, xb, preferred_element_type=f32)
        h1 = jnp.dot(ax.astype(bf), w1b, preferred_element_type=f32) + b1
    else:
        s1 = jnp.dot(xb, w1b, preferred_element_type=f32)
        h1 = jnp.dot(ab, s1.astype(bf), preferred_element_type=f32) + b1
    h1 = jax.nn.relu(h1)
    s2 = jnp.dot(h1.astype(bf), w2b, preferred_element_type=f32)
    logits = jnp.dot(ab, s2.astype(bf), preferred_element_type=f32) + b2
    return jax.nn.log_softmax(logits, axis=1)


def make_adj(key, n):
    """Symmetric, row-normalized adjacency with self loops (dense)."""
    a = (jax.random.uniform(key, (n, n)) > 0.9).astype(jnp.float32)
    a = jnp.maximum(a, a.T) + jnp.eye(n, dtype=jnp.float32)
    return a / jnp.sum(a, axis=1, keepdims=True)


if __name__ == "__main__":
    key = jax.random.PRNGKey(0)

    # --- Test 1: toy graph through the fused single-call kernel -------------
    N, nfeat, nhid, nclass = 64, 32, 16, 8
    k_x, k_adj, k_p, key = jax.random.split(key, 4)
    x = jax.random.normal(k_x, (N, nfeat), jnp.float32)
    adj = make_adj(k_adj, N)
    w1, b1, w2, b2 = init_gcn_params(k_p, nfeat, nhid, nclass)
    params = prep_gcn_params(w1, b1, w2, b2)        # one-time prep

    out = jax.block_until_ready(gcn_forward_fused(x, adj, params))
    ref = reference_forward(x, adj, w1, b1, w2, b2,
                            adj_x_first=(nfeat < params[0].shape[1]))
    assert out.shape == (N, nclass)
    assert bool(jnp.all(jnp.isfinite(out))), "non-finite values (fused)"
    assert jnp.allclose(out, ref, atol=2e-3, rtol=2e-3), "fused mismatch"

    # --- Test 2: larger graph through the row-tiled, parallel-grid path -----
    N2, nfeat2, nhid2, nclass2 = 256, 96, 32, 7
    k_x2, k_adj2, k_p2, key = jax.random.split(key, 4)
    x2 = jax.random.normal(k_x2, (N2, nfeat2), jnp.float32)
    adj2 = make_adj(k_adj2, N2)
    w1t, b1t, w2t, b2t = init_gcn_params(k_p2, nfeat2, nhid2, nclass2)
    params2 = prep_gcn_params(w1t, b1t, w2t, b2t)

    out2 = jax.block_until_ready(gcn_forward_tiled(x2, adj2, params2, tm=128))
    ref2 = reference_forward(x2, adj2, w1t, b1t, w2t, b2t, adj_x_first=False)
    assert out2.shape == (N2, nclass2)
    assert bool(jnp.all(jnp.isfinite(out2))), "non-finite values (tiled)"
    assert jnp.allclose(out2, ref2, atol=2e-3, rtol=2e-3), "tiled mismatch"

    print("KERNEL_OK")
</pallas_src>

<mosaic_0001>
module attributes {stable_mosaic.version = 11 : i64} {
  func.func @gcn_fused_kernel(%arg0: memref<64x32xbf16, #tpu.memory_space<vmem>>, %arg1: memref<64x64xbf16, #tpu.memory_space<vmem>>, %arg2: memref<32x128xbf16, #tpu.memory_space<vmem>>, %arg3: memref<1x128xf32, #tpu.memory_space<vmem>>, %arg4: memref<128x128xbf16, #tpu.memory_space<vmem>>, %arg5: memref<1x128xf32, #tpu.memory_space<vmem>>, %arg6: memref<64x128xf32, #tpu.memory_space<vmem>>) attributes {dimension_semantics = [], scalar_prefetch = 0 : i64, scratch_operands = 0 : i64, tpu.core_type = #tpu.core_type<tc>} {
    %c0 = arith.constant 0 : index
    %c0_0 = arith.constant 0 : index
    %0 = vector.load %arg0[%c0, %c0_0] : memref<64x32xbf16, #tpu.memory_space<vmem>>, vector<64x32xbf16>
    %c0_1 = arith.constant 0 : index
    %c0_2 = arith.constant 0 : index
    %1 = vector.load %arg1[%c0_1, %c0_2] : memref<64x64xbf16, #tpu.memory_space<vmem>>, vector<64x64xbf16>
    %cst = arith.constant dense<0.000000e+00> : vector<64x32xf32>
    %2 = tpu.matmul %1, %0, %cst {dimension_numbers = #tpu.dot_dimension_numbers<[1], [0], [0], [1], [0, 0, 1, 1], [], []>} : vector<64x64xbf16>, vector<64x32xbf16>, vector<64x32xf32> -> vector<64x32xf32>
    %3 = arith.truncf %2 : vector<64x32xf32> to vector<64x32xbf16>
    %c0_3 = arith.constant 0 : index
    %c0_4 = arith.constant 0 : index
    %4 = vector.load %arg2[%c0_3, %c0_4] : memref<32x128xbf16, #tpu.memory_space<vmem>>, vector<32x128xbf16>
    %cst_5 = arith.constant dense<0.000000e+00> : vector<64x128xf32>
    %5 = tpu.matmul %3, %4, %cst_5 {dimension_numbers = #tpu.dot_dimension_numbers<[1], [0], [0], [1], [0, 0, 1, 1], [], []>} : vector<64x32xbf16>, vector<32x128xbf16>, vector<64x128xf32> -> vector<64x128xf32>
    %c0_6 = arith.constant 0 : index
    %c0_7 = arith.constant 0 : index
    %6 = vector.load %arg3[%c0_6, %c0_7] : memref<1x128xf32, #tpu.memory_space<vmem>>, vector<1x128xf32>
    %7 = vector.broadcast %6 : vector<1x128xf32> to vector<64x128xf32>
    %8 = arith.addf %5, %7 : vector<64x128xf32>
    %cst_8 = arith.constant 0.000000e+00 : f32
    %9 = vector.broadcast %cst_8 : f32 to vector<64x128xf32>
    %10 = arith.maximumf %8, %9 : vector<64x128xf32>
    %11 = arith.truncf %10 : vector<64x128xf32> to vector<64x128xbf16>
    %c0_9 = arith.constant 0 : index
    %c0_10 = arith.constant 0 : index
    %12 = vector.load %arg4[%c0_9, %c0_10] : memref<128x128xbf16, #tpu.memory_space<vmem>>, vector<128x128xbf16>
    %cst_11 = arith.constant dense<0.000000e+00> : vector<64x128xf32>
    %13 = tpu.matmul %11, %12, %cst_11 {dimension_numbers = #tpu.dot_dimension_numbers<[1], [0], [0], [1], [0, 0, 1, 1], [], []>} : vector<64x128xbf16>, vector<128x128xbf16>, vector<64x128xf32> -> vector<64x128xf32>
    %14 = arith.truncf %13 : vector<64x128xf32> to vector<64x128xbf16>
    %cst_12 = arith.constant dense<0.000000e+00> : vector<64x128xf32>
    %15 = tpu.matmul %1, %14, %cst_12 {dimension_numbers = #tpu.dot_dimension_numbers<[1], [0], [0], [1], [0, 0, 1, 1], [], []>} : vector<64x64xbf16>, vector<64x128xbf16>, vector<64x128xf32> -> vector<64x128xf32>
    %c0_13 = arith.constant 0 : index
    %c0_14 = arith.constant 0 : index
    %16 = vector.load %arg5[%c0_13, %c0_14] : memref<1x128xf32, #tpu.memory_space<vmem>>, vector<1x128xf32>
    %17 = vector.broadcast %16 : vector<1x128xf32> to vector<64x128xf32>
    %18 = arith.addf %15, %17 : vector<64x128xf32>
    %cst_15 = arith.constant dense<0xFF800000> : vector<64xf32>
    %19 = vector.multi_reduction <maximumf>, %18, %cst_15 [1] : vector<64x128xf32> to vector<64xf32>
    %20 = vector.shape_cast %19 : vector<64xf32> to vector<64x1xf32>
    %21 = vector.broadcast %20 : vector<64x1xf32> to vector<64x128xf32>
    %22 = arith.subf %18, %21 : vector<64x128xf32>
    %23 = math.exp %22 : vector<64x128xf32>
    %cst_16 = arith.constant dense<0.000000e+00> : vector<64xf32>
    %24 = vector.multi_reduction <add>, %23, %cst_16 [1] : vector<64x128xf32> to vector<64xf32>
    %25 = vector.shape_cast %24 : vector<64xf32> to vector<64x1xf32>
    %26 = math.log %25 : vector<64x1xf32>
    %27 = vector.broadcast %26 : vector<64x1xf32> to vector<64x128xf32>
    %28 = arith.subf %22, %27 : vector<64x128xf32>
    %c0_17 = arith.constant 0 : index
    %c0_18 = arith.constant 0 : index
    %29 = vector.load %arg6[%c0_17, %c0_18] : memref<64x128xf32, #tpu.memory_space<vmem>>, vector<64x128xf32>
    tpu.vector_store %arg6[%c0_17, %c0_18], %28 {strides = array<i32>} : memref<64x128xf32, #tpu.memory_space<vmem>>, vector<64x128xf32>,
    return
  }
}

</mosaic_0001>

<llo_original>
// kernel: tpu_custom_call.1
$region0: #{tpu_custom_call.1}
  #allocation0 [shape = 'u32[]', space=smem, size = 0x4, offset = 0x4, fixed_abs, tag = 'smem constant byte address 0x4 - core index']
  #allocation1 [shape = 'u32[144,128]{1,0:T(1,128)}', space=vmem, size = 0x12000, scoped, tag = 'internal scratch']
  %s0 = inlined_call_operand.vmem [shape: bf16[64,32], index: 0, kind: input, shape index: {}]
  %s1 = inlined_call_operand.vmem [shape: bf16[64,64], index: 1, kind: input, shape index: {}]
  %s2 = inlined_call_operand.vmem [shape: bf16[32,128], index: 2, kind: input, shape index: {}]
  %s3 = inlined_call_operand.vmem [shape: f32[1,128], index: 3, kind: input, shape index: {}]
  %s4 = inlined_call_operand.hbm [shape: bf16[128,128], index: 4, kind: input, shape index: {}]
  %s5 = inlined_call_operand.vmem [shape: f32[1,128], index: 5, kind: input, shape index: {}]
  %s6 = inlined_call_operand.hbm [shape: f32[64,128], index: 6, kind: output, shape index: {}]
  %s7 = sld [smem:[#allocation0]]
  $region38: #{tpu_custom_call.1} parent=0
    _
  %s9 = ssub.s32 1, %s7
  %s10 = scalar_select 0, %s9, %s7
  $region1: #{tpu_custom_call.1} parent=0
    #allocation2 [shape = 'u8[32768]{0}', space=vmem, size = 0x8000, scoped, tag = 'input window, operand 4, single buffered']
    #allocation3 [shape = 's32[1]{0}', space=sflag, size = 0x4, scoped, tag = 'scoped memory for tpu_custom_call.1']
    #allocation4 [shape = 's32[1]{0}', space=sflag, size = 0x4, scoped, tag = 'scoped memory for tpu_custom_call.1']
    #allocation5 [shape = 'u8[32768]{0}', space=vmem, size = 0x8000, scoped, tag = 'output window, operand 0, single buffered']
    %11 = vsyncpa [#allocation3], 0
    %12 = vsyncpa [#allocation4], 0
    // Predicated region
    $region2: #{tpu_custom_call.1} parent=1 // pred_check
      _
    $region3: #{tpu_custom_call.1} parent=1 // pred_check_branch
      %14 = sbr.rel (0) target = $region5
    $region4: #{tpu_custom_call.1} parent=1 // pred_region
      _
    $region5: #{tpu_custom_call.1} parent=1 // pred_fallthru
      _
    // Predicated region
    $region6: #{tpu_custom_call.1} parent=1 // pred_check
      _
    $region7: #{tpu_custom_call.1} parent=1 // pred_check_branch
      %16 = sbr.rel (0) target = $region9
    $region8: #{tpu_custom_call.1} parent=1 // pred_region
      _
    $region9: #{tpu_custom_call.1} parent=1 // pred_fallthru
      _
    // Predicated region
    $region10: #{tpu_custom_call.1} parent=1 // pred_check
      _
    $region11: #{tpu_custom_call.1} parent=1 // pred_check_branch
      %18 = sbr.rel (0) target = $region13
    $region12: #{tpu_custom_call.1} parent=1 // pred_region
      _
    $region13: #{tpu_custom_call.1} parent=1 // pred_fallthru
      _
    // Predicated region
    $region14: #{tpu_custom_call.1} parent=1 // pred_check
      _
    $region15: #{tpu_custom_call.1} parent=1 // pred_check_branch
      %20 = sbr.rel (0) target = $region17
    $region16: #{tpu_custom_call.1} parent=1 // pred_region
      _
    $region17: #{tpu_custom_call.1} parent=1 // pred_fallthru
      _
    // Predicated region
    $region18: #{tpu_custom_call.1} parent=1 // pred_check
      _
    $region19: #{tpu_custom_call.1} parent=1 // pred_check_branch
      %22 = sbr.rel (0) target = $region21
    $region20: #{tpu_custom_call.1} parent=1 // pred_region
      %s24 = ssub.s32 1024, 1024
      %25 = vsyncadd [#allocation3], %s24
      %s26 = sshll.u32 [#allocation2], 4
      %s27 = int_to_ptr.vmem [resolvable:$true] %s26
      %32 = dma.hbm_to_vmem [thread:$0]  %s4, 1024, %s27, [#allocation3], 64, 64, 4
    $region21: #{tpu_custom_call.1} parent=1 // pred_fallthru
      _
    // Predicated region
    $region22: #{tpu_custom_call.1} parent=1 // pred_check
      _
    $region23: #{tpu_custom_call.1} parent=1 // pred_check_branch
      %34 = sbr.rel (0) target = $region25
    $region24: #{tpu_custom_call.1} parent=1 // pred_region
      _
    $region25: #{tpu_custom_call.1} parent=1 // pred_fallthru
      _
    // Predicated region
    $region26: #{tpu_custom_call.1} parent=1 // pred_check
      _
    $region27: #{tpu_custom_call.1} parent=1 // pred_check_branch
      %36 = sbr.rel (0) target = $region29
    $region28: #{tpu_custom_call.1} parent=1 // pred_region
      %37 = dma.done [#allocation3], 1024
    $region29: #{tpu_custom_call.1} parent=1 // pred_fallthru
      _
    %v39 = vld [vmem:[%s0] sm:$0xf]
    %v40 = vld [vmem:[%s0 + $0x4] sm:$0xf]
    %v41 = vld [vmem:[%s0 + $0x8] sm:$0xf]
    %v42 = vld [vmem:[%s0 + $0xc] sm:$0xf]
    %v43 = vld [vmem:[%s0 + $0x10] sm:$0xf]
    %v44 = vld [vmem:[%s0 + $0x14] sm:$0xf]
    %v45 = vld [vmem:[%s0 + $0x18] sm:$0xf]
    %v46 = vld [vmem:[%s0 + $0x1c] sm:$0xf]
    %v47 = vld [vmem:[%s1] sm:$0xf]
    %v48 = vld [vmem:[%s1 + $0x4] sm:$0xf]
    %v49 = vld [vmem:[%s1 + $0x8] sm:$0xf]
    %v50 = vld [vmem:[%s1 + $0xc] sm:$0xf]
    %v51 = vld [vmem:[%s1 + $0x10] sm:$0xf]
    %v52 = vld [vmem:[%s1 + $0x14] sm:$0xf]
    %v53 = vld [vmem:[%s1 + $0x18] sm:$0xf]
    %v54 = vld [vmem:[%s1 + $0x1c] sm:$0xf]
    %v63 = vunpack.c.l.b16 %v47
    %v64 = vunpack.c.l.b16 %v48
    %v65 = vunpack.c.l.b16 %v49
    %v66 = vunpack.c.l.b16 %v50
    %v67 = vunpack.c.l.b16 %v51
    %v68 = vunpack.c.l.b16 %v52
    %v69 = vunpack.c.l.b16 %v53
    %v70 = vunpack.c.l.b16 %v54
    %v71 = vpack.c.b16 %v64, %v63
    %v72 = vpack.c.b16 %v66, %v65
    %v73 = vpack.c.b16 %v68, %v67
    %v74 = vpack.c.b16 %v70, %v69
    %v83 = vunpack.c.l.b16 %v39
    %v84 = vunpack.c.l.b16 %v40
    %v85 = vunpack.c.l.b16 %v41
    %v86 = vunpack.c.l.b16 %v42
    %v87 = vunpack.c.l.b16 %v43
    %v88 = vunpack.c.l.b16 %v44
    %v89 = vunpack.c.l.b16 %v45
    %v90 = vunpack.c.l.b16 %v46
    %v91 = vpack.c.b16 %v84, %v83
    %v92 = vpack.c.b16 %v86, %v85
    %v93 = vpack.c.b16 %v88, %v87
    %v94 = vpack.c.b16 %v90, %v89
    %vm99 = vcmask 523264
    %v101 = vsel %vm99, %v71, 0
    %v104 = vsel %vm99, %v72, 0
    %v107 = vsel %vm99, %v73, 0
    %v110 = vsel %vm99, %v74, 0
    %112 = vmatprep.subr.bf16.mxu0 0
    %113 = vmatpush1.bf16.msra.mxu0 0
    %114 = vmatprep.subr.bf16.mxu0 0
    %115 = vmatpush1.bf16.msra.mxu0 0
    %116 = vmatprep.subr.bf16.mxu0 0
    %117 = vmatpush1.bf16.msra.mxu0 0
    %118 = vmatprep.subr.bf16.mxu0 0
    %119 = vmatpush1.bf16.msra.mxu0 0
    %120 = vmatprep.subr.bf16.mxu0 0
    %121 = vmatpush1.bf16.msra.mxu0 %v94
    %122 = vmatprep.subr.bf16.mxu0 0
    %123 = vmatpush1.bf16.msra.mxu0 %v93
    %124 = vmatprep.subr.bf16.mxu0 0
    %125 = vmatpush1.bf16.msra.mxu0 %v92
    %126 = vmatprep.subr.bf16.mxu0 0
    %127 = vmatpush1.bf16.msra.mxu0 %v91
    %128 = vmatprep.subr.bf16.mxu0 0
    %129 = vmatpush2.bf16.msra.mxu0 0
    %130 = vmatprep.subr.bf16.mxu0 0
    %131 = vmatpush2.bf16.msra.mxu0 0
    %132 = vmatprep.subr.bf16.mxu0 0
    %133 = vmatpush2.bf16.msra.mxu0 0
    %134 = vmatprep.subr.bf16.mxu0 0
    %135 = vmatpush2.bf16.msra.mxu0 0
    %136 = vmatprep.subr.bf16.mxu0 0
    %137 = vmatpush2.bf16.msra.mxu0 0
    %138 = vmatprep.subr.bf16.mxu0 0
    %139 = vmatpush2.bf16.msra.mxu0 0
    %140 = vmatprep.subr.bf16.mxu0 0
    %141 = vmatpush2.bf16.msra.mxu0 0
    %142 = vmatprep.subr.bf16.mxu0 0
    %143 = vmatpush2.bf16.msra.mxu0 0
    %144 = vmatprep.mubr.bf16.mxu0 0
    %145 = vmatmul.mubr.bf16.gmra.mxu0 %v101
    %v146 = vpop.f32.mrf.mxu0
    %v147 = vadd.f32 0.0, %v146
    %v148 = vpop.f32.mrf.mxu0
    %v149 = vpop.f32.mrf.mxu0
    %v150 = vadd.f32 0.0, %v149
    %v151 = vpop.f32.mrf.mxu0
    %152 = vmatprep.mubr.bf16.mxu0 0
    %153 = vmatmul.mubr.bf16.gmra.mxu0 %v104
    %v154 = vpop.f32.mrf.mxu0
    %v155 = vadd.f32 0.0, %v154
    %v156 = vpop.f32.mrf.mxu0
    %v157 = vpop.f32.mrf.mxu0
    %v158 = vadd.f32 0.0, %v157
    %v159 = vpop.f32.mrf.mxu0
    %160 = vmatprep.mubr.bf16.mxu0 0
    %161 = vmatmul.mubr.bf16.gmra.mxu0 %v107
    %v162 = vpop.f32.mrf.mxu0
    %v163 = vadd.f32 0.0, %v162
    %v164 = vpop.f32.mrf.mxu0
    %v165 = vpop.f32.mrf.mxu0
    %v166 = vadd.f32 0.0, %v165
    %v167 = vpop.f32.mrf.mxu0
    %168 = vmatprep.mubr.bf16.mxu0 0
    %169 = vmatmul.mubr.bf16.gmra.mxu0 %v110
    %v170 = vpop.f32.mrf.mxu0
    %v171 = vadd.f32 0.0, %v170
    %v172 = vpop.f32.mrf.mxu0
    %v173 = vpop.f32.mrf.mxu0
    %v174 = vadd.f32 0.0, %v173
    %v175 = vpop.f32.mrf.mxu0
    %176 = vdwg.mxu0
    %v177 = vpack.c.bf16 %v150, %v147
    %v178 = vpack.c.bf16 %v158, %v155
    %v179 = vpack.c.bf16 %v166, %v163
    %v180 = vpack.c.bf16 %v174, %v171
    %v181 = vld [vmem:[%s2] sm:$0xf]
    %v182 = vld [vmem:[%s2 + $0x4] sm:$0xf]
    %v183 = vld [vmem:[%s2 + $0x8] sm:$0xf]
    %v184 = vld [vmem:[%s2 + $0xc] sm:$0xf]
    %v185 = vld [vmem:[%s3] sm:$0x1]
    %v187 = vlaneseq
    %v188 = vshrl.u32 %v187, 7
    %v189 = vsub.s32 0, %v188
    %v190 = vrot.slane %v185, %v189
    %v196 = vunpack.c.l.b16 %v181
    %v197 = vunpack.c.l.b16 %v182
    %v198 = vunpack.c.l.b16 %v183
    %v199 = vunpack.c.l.b16 %v184
    %v200 = vpack.c.b16 %v197, %v196
    %v201 = vpack.c.b16 %v199, %v198
    %vm204 = vcmask 261120
    %v206 = vsel %vm204, %v177, 0
    %v209 = vsel %vm204, %v178, 0
    %v212 = vsel %vm204, %v179, 0
    %v215 = vsel %vm204, %v180, 0
    %217 = vmatprep.subr.bf16.mxu0 0
    %218 = vmatpush1.bf16.msra.mxu0 0
    %219 = vmatprep.subr.bf16.mxu0 0
    %220 = vmatpush1.bf16.msra.mxu0 0
    %221 = vmatprep.subr.bf16.mxu0 0
    %222 = vmatpush1.bf16.msra.mxu0 0
    %223 = vmatprep.subr.bf16.mxu0 0
    %224 = vmatpush1.bf16.msra.mxu0 0
    %225 = vmatprep.subr.bf16.mxu0 0
    %226 = vmatpush1.bf16.msra.mxu0 0
    %227 = vmatprep.subr.bf16.mxu0 0
    %228 = vmatpush1.bf16.msra.mxu0 0
    %229 = vmatprep.subr.bf16.mxu0 0
    %230 = vmatpush1.bf16.msra.mxu0 %v201
    %231 = vmatprep.subr.bf16.mxu0 0
    %232 = vmatpush1.bf16.msra.mxu0 %v200
    %233 = vmatprep.subr.bf16.mxu0 0
    %234 = vmatpush2.bf16.msra.mxu0 0
    %235 = vmatprep.subr.bf16.mxu0 0
    %236 = vmatpush2.bf16.msra.mxu0 0
    %237 = vmatprep.subr.bf16.mxu0 0
    %238 = vmatpush2.bf16.msra.mxu0 0
    %239 = vmatprep.subr.bf16.mxu0 0
    %240 = vmatpush2.bf16.msra.mxu0 0
    %241 = vmatprep.subr.bf16.mxu0 0
    %242 = vmatpush2.bf16.msra.mxu0 0
    %243 = vmatprep.subr.bf16.mxu0 0
    %244 = vmatpush2.bf16.msra.mxu0 0
    %245 = vmatprep.subr.bf16.mxu0 0
    %246 = vmatpush2.bf16.msra.mxu0 0
    %247 = vmatprep.subr.bf16.mxu0 0
    %248 = vmatpush2.bf16.msra.mxu0 0
    %249 = vmatprep.mubr.bf16.mxu0 0
    %250 = vmatmul.mubr.bf16.gmra.mxu0 %v206
    %v251 = vpop.f32.mrf.mxu0
    %v252 = vadd.f32 %v190, %v251
    %v253 = vpop.f32.mrf.mxu0
    %v254 = vpop.f32.mrf.mxu0
    %v255 = vadd.f32 %v190, %v254
    %v256 = vpop.f32.mrf.mxu0
    %257 = vmatprep.mubr.bf16.mxu0 0
    %258 = vmatmul.mubr.bf16.gmra.mxu0 %v209
    %v259 = vpop.f32.mrf.mxu0
    %v260 = vadd.f32 %v190, %v259
    %v261 = vpop.f32.mrf.mxu0
    %v262 = vpop.f32.mrf.mxu0
    %v263 = vadd.f32 %v190, %v262
    %v264 = vpop.f32.mrf.mxu0
    %265 = vmatprep.mubr.bf16.mxu0 0
    %266 = vmatmul.mubr.bf16.gmra.mxu0 %v212
    %v267 = vpop.f32.mrf.mxu0
    %v268 = vadd.f32 %v190, %v267
    %v269 = vpop.f32.mrf.mxu0
    %v270 = vpop.f32.mrf.mxu0
    %v271 = vadd.f32 %v190, %v270
    %v272 = vpop.f32.mrf.mxu0
    %273 = vmatprep.mubr.bf16.mxu0 0
    %274 = vmatmul.mubr.bf16.gmra.mxu0 %v215
    %v275 = vpop.f32.mrf.mxu0
    %v276 = vadd.f32 %v190, %v275
    %v277 = vpop.f32.mrf.mxu0
    %v278 = vpop.f32.mrf.mxu0
    %v279 = vadd.f32 %v190, %v278
    %v280 = vpop.f32.mrf.mxu0
    %281 = vdwg.mxu0
    %v282 = vmax.f32 %v252, 0.0
    %v283 = vmax.f32 %v255, 0.0
    %v284 = vmax.f32 %v260, 0.0
    %v285 = vmax.f32 %v263, 0.0
    %v286 = vmax.f32 %v268, 0.0
    %v287 = vmax.f32 %v271, 0.0
    %v288 = vmax.f32 %v276, 0.0
    %v289 = vmax.f32 %v279, 0.0
    %v290 = vpack.c.bf16 %v283, %v282
    %v291 = vpack.c.bf16 %v285, %v284
    %v292 = vpack.c.bf16 %v287, %v286
    %v293 = vpack.c.bf16 %v289, %v288
    %v294 = vld [vmem:[#allocation2] sm:$0xf]
    %v295 = vld [vmem:[#allocation2 + $0x4] sm:$0xf]
    %v296 = vld [vmem:[#allocation2 + $0x8] sm:$0xf]
    %v297 = vld [vmem:[#allocation2 + $0xc] sm:$0xf]
    %v298 = vld [vmem:[#allocation2 + $0x10] sm:$0xf]
    %v299 = vld [vmem:[#allocation2 + $0x14] sm:$0xf]
    %v300 = vld [vmem:[#allocation2 + $0x18] sm:$0xf]
    %v301 = vld [vmem:[#allocation2 + $0x1c] sm:$0xf]
    %v302 = vld [vmem:[#allocation2 + $0x20] sm:$0xf]
    %v303 = vld [vmem:[#allocation2 + $0x24] sm:$0xf]
    %v304 = vld [vmem:[#allocation2 + $0x28] sm:$0xf]
    %v305 = vld [vmem:[#allocation2 + $0x2c] sm:$0xf]
    %v306 = vld [vmem:[#allocation2 + $0x30] sm:$0xf]
    %v307 = vld [vmem:[#allocation2 + $0x34] sm:$0xf]
    %v308 = vld [vmem:[#allocation2 + $0x38] sm:$0xf]
    %v309 = vld [vmem:[#allocation2 + $0x3c] sm:$0xf]
    %v326 = vunpack.c.l.b16 %v294
    %v327 = vunpack.c.l.b16 %v295
    %v328 = vunpack.c.l.b16 %v296
    %v329 = vunpack.c.l.b16 %v297
    %v330 = vunpack.c.l.b16 %v298
    %v331 = vunpack.c.l.b16 %v299
    %v332 = vunpack.c.l.b16 %v300
    %v333 = vunpack.c.l.b16 %v301
    %v334 = vunpack.c.l.b16 %v302
    %v335 = vunpack.c.l.b16 %v303
    %v336 = vunpack.c.l.b16 %v304
    %v337 = vunpack.c.l.b16 %v305
    %v338 = vunpack.c.l.b16 %v306
    %v339 = vunpack.c.l.b16 %v307
    %v340 = vunpack.c.l.b16 %v308
    %v341 = vunpack.c.l.b16 %v309
    %v342 = vpack.c.b16 %v327, %v326
    %v343 = vpack.c.b16 %v329, %v328
    %v344 = vpack.c.b16 %v331, %v330
    %v345 = vpack.c.b16 %v333, %v332
    %v346 = vpack.c.b16 %v335, %v334
    %v347 = vpack.c.b16 %v337, %v336
    %v348 = vpack.c.b16 %v339, %v338
    %v349 = vpack.c.b16 %v341, %v340
    %358 = vmatprep.subr.bf16.mxu0 0
    %359 = vmatpush1.bf16.msra.mxu0 %v349
    %360 = vmatprep.subr.bf16.mxu0 0
    %361 = vmatpush1.bf16.msra.mxu0 %v348
    %362 = vmatprep.subr.bf16.mxu0 0
    %363 = vmatpush1.bf16.msra.mxu0 %v347
    %364 = vmatprep.subr.bf16.mxu0 0
    %365 = vmatpush1.bf16.msra.mxu0 %v346
    %366 = vmatprep.subr.bf16.mxu0 0
    %367 = vmatpush1.bf16.msra.mxu0 %v345
    %368 = vmatprep.subr.bf16.mxu0 0
    %369 = vmatpush1.bf16.msra.mxu0 %v344
    %370 = vmatprep.subr.bf16.mxu0 0
    %371 = vmatpush1.bf16.msra.mxu0 %v343
    %372 = vmatprep.subr.bf16.mxu0 0
    %373 = vmatpush1.bf16.msra.mxu0 %v342
    %374 = vmatprep.subr.bf16.mxu0 0
    %375 = vmatpush2.bf16.msra.mxu0 0
    %376 = vmatprep.subr.bf16.mxu0 0
    %377 = vmatpush2.bf16.msra.mxu0 0
    %378 = vmatprep.subr.bf16.mxu0 0
    %379 = vmatpush2.bf16.msra.mxu0 0
    %380 = vmatprep.subr.bf16.mxu0 0
    %381 = vmatpush2.bf16.msra.mxu0 0
    %382 = vmatprep.subr.bf16.mxu0 0
    %383 = vmatpush2.bf16.msra.mxu0 0
    %384 = vmatprep.subr.bf16.mxu0 0
    %385 = vmatpush2.bf16.msra.mxu0 0
    %386 = vmatprep.subr.bf16.mxu0 0
    %387 = vmatpush2.bf16.msra.mxu0 0
    %388 = vmatprep.subr.bf16.mxu0 0
    %389 = vmatpush2.bf16.msra.mxu0 0
    %390 = vmatprep.mubr.bf16.mxu0 0
    %391 = vmatmul.mubr.bf16.gmra.mxu0 %v290
    %v392 = vpop.f32.mrf.mxu0
    %v393 = vadd.f32 0.0, %v392
    %v394 = vpop.f32.mrf.mxu0
    %v395 = vpop.f32.mrf.mxu0
    %v396 = vadd.f32 0.0, %v395
    %v397 = vpop.f32.mrf.mxu0
    %398 = vmatprep.mubr.bf16.mxu0 0
    %399 = vmatmul.mubr.bf16.gmra.mxu0 %v291
    %v400 = vpop.f32.mrf.mxu0
    %v401 = vadd.f32 0.0, %v400
    %v402 = vpop.f32.mrf.mxu0
    %v403 = vpop.f32.mrf.mxu0
    %v404 = vadd.f32 0.0, %v403
    %v405 = vpop.f32.mrf.mxu0
    %406 = vmatprep.mubr.bf16.mxu0 0
    %407 = vmatmul.mubr.bf16.gmra.mxu0 %v292
    %v408 = vpop.f32.mrf.mxu0
    %v409 = vadd.f32 0.0, %v408
    %v410 = vpop.f32.mrf.mxu0
    %v411 = vpop.f32.mrf.mxu0
    %v412 = vadd.f32 0.0, %v411
    %v413 = vpop.f32.mrf.mxu0
    %414 = vmatprep.mubr.bf16.mxu0 0
    %415 = vmatmul.mubr.bf16.gmra.mxu0 %v293
    %v416 = vpop.f32.mrf.mxu0
    %v417 = vadd.f32 0.0, %v416
    %v418 = vpop.f32.mrf.mxu0
    %v419 = vpop.f32.mrf.mxu0
    %v420 = vadd.f32 0.0, %v419
    %v421 = vpop.f32.mrf.mxu0
    %422 = vdwg.mxu0
    %v423 = vpack.c.bf16 %v396, %v393
    %v424 = vpack.c.bf16 %v404, %v401
    %v425 = vpack.c.bf16 %v412, %v409
    %v426 = vpack.c.bf16 %v420, %v417
    %v427 = vld [vmem:[%s5] sm:$0x1]
    %v429 = vlaneseq
    %v430 = vshrl.u32 %v429, 7
    %v431 = vsub.s32 0, %v430
    %v432 = vrot.slane %v427, %v431
    %434 = vmatprep.subr.bf16.mxu0 0
    %435 = vmatpush1.bf16.msra.mxu0 0
    %436 = vmatprep.subr.bf16.mxu0 0
    %437 = vmatpush1.bf16.msra.mxu0 0
    %438 = vmatprep.subr.bf16.mxu0 0
    %439 = vmatpush1.bf16.msra.mxu0 0
    %440 = vmatprep.subr.bf16.mxu0 0
    %441 = vmatpush1.bf16.msra.mxu0 0
    %442 = vmatprep.subr.bf16.mxu0 0
    %443 = vmatpush1.bf16.msra.mxu0 %v426
    %444 = vmatprep.subr.bf16.mxu0 0
    %445 = vmatpush1.bf16.msra.mxu0 %v425
    %446 = vmatprep.subr.bf16.mxu0 0
    %447 = vmatpush1.bf16.msra.mxu0 %v424
    %448 = vmatprep.subr.bf16.mxu0 0
    %449 = vmatpush1.bf16.msra.mxu0 %v423
    %450 = vmatprep.subr.bf16.mxu0 0
    %451 = vmatpush2.bf16.msra.mxu0 0
    %452 = vmatprep.subr.bf16.mxu0 0
    %453 = vmatpush2.bf16.msra.mxu0 0
    %454 = vmatprep.subr.bf16.mxu0 0
    %455 = vmatpush2.bf16.msra.mxu0 0
    %456 = vmatprep.subr.bf16.mxu0 0
    %457 = vmatpush2.bf16.msra.mxu0 0
    %458 = vmatprep.subr.bf16.mxu0 0
    %459 = vmatpush2.bf16.msra.mxu0 0
    %460 = vmatprep.subr.bf16.mxu0 0
    %461 = vmatpush2.bf16.msra.mxu0 0
    %462 = vmatprep.subr.bf16.mxu0 0
    %463 = vmatpush2.bf16.msra.mxu0 0
    %464 = vmatprep.subr.bf16.mxu0 0
    %465 = vmatpush2.bf16.msra.mxu0 0
    %466 = vmatprep.mubr.bf16.mxu0 0
    %467 = vmatmul.mubr.bf16.gmra.mxu0 %v101
    %v468 = vpop.f32.mrf.mxu0
    %v469 = vadd.f32 %v432, %v468
    %v470 = vpop.f32.mrf.mxu0
    %v471 = vpop.f32.mrf.mxu0
    %v472 = vadd.f32 %v432, %v471
    %v473 = vpop.f32.mrf.mxu0
    %474 = vmatprep.mubr.bf16.mxu0 0
    %475 = vmatmul.mubr.bf16.gmra.mxu0 %v104
    %v476 = vpop.f32.mrf.mxu0
    %v477 = vadd.f32 %v432, %v476
    %v478 = vpop.f32.mrf.mxu0
    %v479 = vpop.f32.mrf.mxu0
    %v480 = vadd.f32 %v432, %v479
    %v481 = vpop.f32.mrf.mxu0
    %482 = vmatprep.mubr.bf16.mxu0 0
    %483 = vmatmul.mubr.bf16.gmra.mxu0 %v107
    %v484 = vpop.f32.mrf.mxu0
    %v485 = vadd.f32 %v432, %v484
    %v486 = vpop.f32.mrf.mxu0
    %v487 = vpop.f32.mrf.mxu0
    %v488 = vadd.f32 %v432, %v487
    %v489 = vpop.f32.mrf.mxu0
    %490 = vmatprep.mubr.bf16.mxu0 0
    %491 = vmatmul.mubr.bf16.gmra.mxu0 %v110
    %v492 = vpop.f32.mrf.mxu0
    %v493 = vadd.f32 %v432, %v492
    %v494 = vpop.f32.mrf.mxu0
    %v495 = vpop.f32.mrf.mxu0
    %v496 = vadd.f32 %v432, %v495
    %v497 = vpop.f32.mrf.mxu0
    %498 = vdwg.mxu0
    %499 = vmax.xlane.f32.xlu0 %v469
    %v500 = vpop.xlane.xlu0 %499
    %501 = vmax.xlane.f32.xlu0 %v472
    %v502 = vpop.xlane.xlu0 %501
    %503 = vmax.xlane.f32.xlu0 %v477
    %v504 = vpop.xlane.xlu0 %503
    %505 = vmax.xlane.f32.xlu0 %v480
    %v506 = vpop.xlane.xlu0 %505
    %507 = vmax.xlane.f32.xlu0 %v485
    %v508 = vpop.xlane.xlu0 %507
    %509 = vmax.xlane.f32.xlu0 %v488
    %v510 = vpop.xlane.xlu0 %509
    %511 = vmax.xlane.f32.xlu0 %v493
    %v512 = vpop.xlane.xlu0 %511
    %513 = vmax.xlane.f32.xlu0 %v496
    %v514 = vpop.xlane.xlu0 %513
    %v515 = vsub.f32 %v469, %v500
    %v516 = vsub.f32 %v472, %v502
    %v517 = vsub.f32 %v477, %v504
    %v518 = vsub.f32 %v480, %v506
    %v519 = vsub.f32 %v485, %v508
    %v520 = vsub.f32 %v488, %v510
    %v521 = vsub.f32 %v493, %v512
    %v522 = vsub.f32 %v496, %v514
    %v523 = vmul.f32 %v515, 1.442695
    %v524 = vpow.pop %v523
    %v525 = vmul.f32 %v516, 1.442695
    %v526 = vpow.pop %v525
    %v527 = vmul.f32 %v517, 1.442695
    %v528 = vpow.pop %v527
    %v529 = vmul.f32 %v518, 1.442695
    %v530 = vpow.pop %v529
    %v531 = vmul.f32 %v519, 1.442695
    %v532 = vpow.pop %v531
    %v533 = vmul.f32 %v520, 1.442695
    %v534 = vpow.pop %v533
    %v535 = vmul.f32 %v521, 1.442695
    %v536 = vpow.pop %v535
    %v537 = vmul.f32 %v522, 1.442695
    %v538 = vpow.pop %v537
    %539 = vadd.xlane.f32.xlu0 %v524
    %v540 = vpop.xlane.xlu0 %539
    %541 = vadd.xlane.f32.xlu0 %v526
    %v542 = vpop.xlane.xlu0 %541
    %543 = vadd.xlane.f32.xlu0 %v528
    %v544 = vpop.xlane.xlu0 %543
    %545 = vadd.xlane.f32.xlu0 %v530
    %v546 = vpop.xlane.xlu0 %545
    %547 = vadd.xlane.f32.xlu0 %v532
    %v548 = vpop.xlane.xlu0 %547
    %549 = vadd.xlane.f32.xlu0 %v534
    %v550 = vpop.xlane.xlu0 %549
    %551 = vadd.xlane.f32.xlu0 %v536
    %v552 = vpop.xlane.xlu0 %551
    %553 = vadd.xlane.f32.xlu0 %v538
    %v554 = vpop.xlane.xlu0 %553
    %v555 = vlog2.pop %v540
    %v556 = vmul.f32 %v555, 0.6931472
    %v557 = vlog2.pop %v542
    %v558 = vmul.f32 %v557, 0.6931472
    %v559 = vlog2.pop %v544
    %v560 = vmul.f32 %v559, 0.6931472
    %v561 = vlog2.pop %v546
    %v562 = vmul.f32 %v561, 0.6931472
    %v563 = vlog2.pop %v548
    %v564 = vmul.f32 %v563, 0.6931472
    %v565 = vlog2.pop %v550
    %v566 = vmul.f32 %v565, 0.6931472
    %v567 = vlog2.pop %v552
    %v568 = vmul.f32 %v567, 0.6931472
    %v569 = vlog2.pop %v554
    %v570 = vmul.f32 %v569, 0.6931472
    %v571 = vsub.f32 %v515, %v556
    %v572 = vsub.f32 %v516, %v558
    %v573 = vsub.f32 %v517, %v560
    %v574 = vsub.f32 %v518, %v562
    %v575 = vsub.f32 %v519, %v564
    %v576 = vsub.f32 %v520, %v566
    %v577 = vsub.f32 %v521, %v568
    %v578 = vsub.f32 %v522, %v570
    %579 = vst [vmem:[#allocation5] sm:$0xff] %v571
    %580 = vst [vmem:[#allocation5 + $0x8] sm:$0xff] %v572
    %581 = vst [vmem:[#allocation5 + $0x10] sm:$0xff] %v573
    %582 = vst [vmem:[#allocation5 + $0x18] sm:$0xff] %v574
    %583 = vst [vmem:[#allocation5 + $0x20] sm:$0xff] %v575
    %584 = vst [vmem:[#allocation5 + $0x28] sm:$0xff] %v576
    %585 = vst [vmem:[#allocation5 + $0x30] sm:$0xff] %v577
    %586 = vst [vmem:[#allocation5 + $0x38] sm:$0xff] %v578
    // Predicated region
    $region30: #{tpu_custom_call.1} parent=1 // pred_check
      _
    $region31: #{tpu_custom_call.1} parent=1 // pred_check_branch
      %588 = sbr.rel (0) target = $region33
    $region32: #{tpu_custom_call.1} parent=1 // pred_region
      %s590 = ssub.s32 1024, 1024
      %591 = vsyncadd [#allocation4], %s590
      %s592 = sshll.u32 [#allocation5], 4
      %s593 = int_to_ptr.vmem [resolvable:$true] %s592
      %598 = dma.vmem_to_hbm [thread:$0]  %s593, 1024, %s6, [#allocation4], 128, 128, 8
    $region33: #{tpu_custom_call.1} parent=1 // pred_fallthru
      _
    // Predicated region
    $region34: #{tpu_custom_call.1} parent=1 // pred_check
      _
    $region35: #{tpu_custom_call.1} parent=1 // pred_check_branch
      %600 = sbr.rel (0) target = $region37
    $region36: #{tpu_custom_call.1} parent=1 // pred_region
      %601 = dma.done [#allocation4], 1024
    $region37: #{tpu_custom_call.1} parent=1 // pred_fallthru
      _
    %602 = vsyncpa [#allocation3], 1
    %603 = vsyncpa [#allocation4], 1

</llo_original>
